<compile_context>
chip_gen: v6e
topology: v6e:2x2x1
jax: 0.10.0
libtpu: 0.0.40
codegen_flags: <defaults>
</compile_context>

<pallas_src>
import functools

import jax
import jax.numpy as jnp
from jax.experimental import pallas as pl
from jax.experimental.pallas import tpu as pltpu

VMEM_LIMIT = 32 * 1024 * 1024   # safe on v5e/v6e/v7x (<= physical VMEM on all)
NEG_INF = -1e30                 # finite "minus infinity" (avoids inf-inf NaNs)
HP = jax.lax.Precision.HIGHEST  # full-f32 precision used only by the reference


def _pick_tile(dim, pref):
    """Largest of (pref, 256, 128) that divides dim, else the full dim."""
    for cand in (pref, 256, 128):
        if cand <= dim and dim % cand == 0:
            return cand
    return dim


# ----------------------------- Pallas kernels -----------------------------

def _rmsnorm_kernel(x_ref, w_ref, o_ref, *, eps):
    x = x_ref[...].astype(jnp.float32)
    var = jnp.mean(x * x, axis=-1, keepdims=True)
    y = x * jax.lax.rsqrt(var + eps)
    o_ref[...] = (y * w_ref[...].astype(jnp.float32)).astype(o_ref.dtype)


def _add_rmsnorm_kernel(x_ref, r_ref, w_ref, o_ref, res_ref, *, eps):
    s = x_ref[...].astype(jnp.float32) + r_ref[...].astype(jnp.float32)
    res_ref[...] = s.astype(res_ref.dtype)
    var = jnp.mean(s * s, axis=-1, keepdims=True)
    y = s * jax.lax.rsqrt(var + eps)
    o_ref[...] = (y * w_ref[...].astype(jnp.float32)).astype(o_ref.dtype)


def _matmul_kernel(x_ref, w_ref, o_ref, acc_ref):
    @pl.when(pl.program_id(2) == 0)
    def _init():
        acc_ref[...] = jnp.zeros_like(acc_ref)

    acc_ref[...] += jnp.dot(x_ref[...], w_ref[...],
                            preferred_element_type=jnp.float32)

    @pl.when(pl.program_id(2) == pl.num_programs(2) - 1)
    def _done():
        o_ref[...] = acc_ref[...].astype(o_ref.dtype)


def _matmul_bias_kernel(x_ref, w_ref, b_ref, o_ref, acc_ref):
    @pl.when(pl.program_id(2) == 0)
    def _init():
        acc_ref[...] = jnp.zeros_like(acc_ref)

    acc_ref[...] += jnp.dot(x_ref[...], w_ref[...],
                            preferred_element_type=jnp.float32)

    @pl.when(pl.program_id(2) == pl.num_programs(2) - 1)
    def _done():
        o_ref[...] = (acc_ref[...] + b_ref[...].astype(jnp.float32)).astype(o_ref.dtype)


def _silu_mul_matmul_kernel(g_ref, u_ref, w_ref, o_ref, acc_ref):
    # SiluAndMul fused into the down_proj prologue: no HBM round trip for the
    # activation and no wrapper-side gate/up slices.
    @pl.when(pl.program_id(2) == 0)
    def _init():
        acc_ref[...] = jnp.zeros_like(acc_ref)

    g = g_ref[...].astype(jnp.float32)
    u = u_ref[...].astype(jnp.float32)
    act = (g * jax.nn.sigmoid(g) * u).astype(w_ref.dtype)
    acc_ref[...] += jnp.dot(act, w_ref[...], preferred_element_type=jnp.float32)

    @pl.when(pl.program_id(2) == pl.num_programs(2) - 1)
    def _done():
        o_ref[...] = acc_ref[...].astype(o_ref.dtype)


def _rope_kernel(x_ref, cos_ref, sin_ref, o_ref, *, d2):
    # NeoX rotate-half via a single XLU lane rotation (no lane-midpoint concat):
    #   out = x * [cos, cos] + roll(x, d2) * [-sin, sin]
    x = x_ref[...].astype(jnp.float32)
    rolled = pltpu.roll(x, shift=d2, axis=1)
    o_ref[...] = (x * cos_ref[...] + rolled * sin_ref[...]).astype(o_ref.dtype)


def _flash_attn_kernel(pos_q_ref, pos_k_ref, q_ref, k_ref, v_ref, o_ref,
                       m_ref, l_ref, acc_ref, *, scale):
    ki = pl.program_id(2)

    @pl.when(ki == 0)
    def _init():
        m_ref[...] = jnp.full_like(m_ref, NEG_INF)
        l_ref[...] = jnp.zeros_like(l_ref)
        acc_ref[...] = jnp.zeros_like(acc_ref)

    pos_q = pos_q_ref[...]            # (tq, 1) int32
    pos_k = pos_k_ref[...]            # (1, tk) int32

    # Causal block skip: the whole KV block lies strictly in the future of
    # every query in this block -> skip the compute (halves attention FLOPs).
    @pl.when(jnp.min(pos_k) <= jnp.max(pos_q))
    def _compute():
        q = q_ref[...]                # (tq, dh) native dtype (bf16/f32)
        k = k_ref[...]                # (tk, dh)
        s = jax.lax.dot_general(
            q, k, (((1,), (1,)), ((), ())),
            preferred_element_type=jnp.float32) * scale          # (tq, tk)
        s = jnp.where(pos_q >= pos_k, s, NEG_INF)                # position mask

        m_prev = m_ref[...]
        m_new = jnp.maximum(m_prev, jnp.max(s, axis=-1, keepdims=True))
        alpha = jnp.exp(m_prev - m_new)
        p = jnp.exp(s - m_new)
        l_ref[...] = alpha * l_ref[...] + jnp.sum(p, axis=-1, keepdims=True)
        acc_ref[...] = alpha * acc_ref[...] + jnp.dot(
            p.astype(v_ref.dtype), v_ref[...],
            preferred_element_type=jnp.float32)
        m_ref[...] = m_new

    @pl.when(ki == pl.num_programs(2) - 1)
    def _done():
        inv_l = pl.reciprocal(l_ref[...], approx=True)
        o_ref[...] = (acc_ref[...] * inv_l).astype(o_ref.dtype)


# ----------------------------- wrappers ------------------------------------

def rmsnorm(x, w, eps, *, tm=256):
    T, H = x.shape
    tm = _pick_tile(T, tm)
    return pl.pallas_call(
        functools.partial(_rmsnorm_kernel, eps=eps),
        grid=(T // tm,),
        in_specs=[pl.BlockSpec((tm, H), lambda i: (i, 0)),
                  pl.BlockSpec((1, H), lambda i: (0, 0))],
        out_specs=pl.BlockSpec((tm, H), lambda i: (i, 0)),
        out_shape=jax.ShapeDtypeStruct((T, H), x.dtype),
        compiler_params=pltpu.CompilerParams(dimension_semantics=("parallel",)),
    )(x, w.reshape(1, H))


def add_rmsnorm(x, residual, w, eps, *, tm=256):
    T, H = x.shape
    tm = _pick_tile(T, tm)
    spec = pl.BlockSpec((tm, H), lambda i: (i, 0))
    return pl.pallas_call(
        functools.partial(_add_rmsnorm_kernel, eps=eps),
        grid=(T // tm,),
        in_specs=[spec, spec, pl.BlockSpec((1, H), lambda i: (0, 0))],
        out_specs=[spec, spec],
        out_shape=(jax.ShapeDtypeStruct((T, H), x.dtype),
                   jax.ShapeDtypeStruct((T, H), x.dtype)),
        compiler_params=pltpu.CompilerParams(dimension_semantics=("parallel",)),
    )(x, residual, w.reshape(1, H))


def linear(x, w, b=None, *, tm=256, tn=256, tk=256):
    M, K = x.shape
    Kw, N = w.shape
    assert K == Kw
    tm = _pick_tile(M, tm)
    tn = _pick_tile(N, tn)
    tk = _pick_tile(K, tk)
    grid = (M // tm, N // tn, K // tk)
    x_spec = pl.BlockSpec((tm, tk), lambda i, j, k: (i, k))
    w_spec = pl.BlockSpec((tk, tn), lambda i, j, k: (k, j))
    o_spec = pl.BlockSpec((tm, tn), lambda i, j, k: (i, j))
    cparams = pltpu.CompilerParams(
        dimension_semantics=("parallel", "parallel", "arbitrary"),
        vmem_limit_bytes=VMEM_LIMIT)
    out_shape = jax.ShapeDtypeStruct((M, N), x.dtype)
    scratch = [pltpu.VMEM((tm, tn), jnp.float32)]
    if b is None:
        return pl.pallas_call(
            _matmul_kernel, grid=grid, in_specs=[x_spec, w_spec],
            out_specs=o_spec, out_shape=out_shape, scratch_shapes=scratch,
            compiler_params=cparams)(x, w)
    b_spec = pl.BlockSpec((1, tn), lambda i, j, k: (0, j))
    return pl.pallas_call(
        _matmul_bias_kernel, grid=grid, in_specs=[x_spec, w_spec, b_spec],
        out_specs=o_spec, out_shape=out_shape, scratch_shapes=scratch,
        compiler_params=cparams)(x, w, b.reshape(1, N))


def mlp_silu_down(gate_up, w, intermediate_size, *, tm=256, tn=256, tk=256):
    """down_proj(SiluAndMul(gate_up)) with the activation fused in-kernel."""
    T = gate_up.shape[0]
    I = intermediate_size
    K, N = w.shape
    assert K == I and gate_up.shape[1] == 2 * I
    tm = _pick_tile(T, tm)
    tn = _pick_tile(N, tn)
    tkk = _pick_tile(I, tk)
    koff = I // tkk
    grid = (T // tm, N // tn, I // tkk)
    return pl.pallas_call(
        _silu_mul_matmul_kernel,
        grid=grid,
        in_specs=[
            pl.BlockSpec((tm, tkk), lambda i, j, k: (i, k)),          # gate cols
            pl.BlockSpec((tm, tkk), lambda i, j, k: (i, k + koff)),   # up cols
            pl.BlockSpec((tkk, tn), lambda i, j, k: (k, j)),
        ],
        out_specs=pl.BlockSpec((tm, tn), lambda i, j, k: (i, j)),
        out_shape=jax.ShapeDtypeStruct((T, N), gate_up.dtype),
        scratch_shapes=[pltpu.VMEM((tm, tn), jnp.float32)],
        compiler_params=pltpu.CompilerParams(
            dimension_semantics=("parallel", "parallel", "arbitrary"),
            vmem_limit_bytes=VMEM_LIMIT),
    )(gate_up, gate_up, w)


def apply_rope(qkv, cos_full, sin_full, nh, nkv, dh, *, tr=256):
    """Rotate q and k heads (columns [0, (nh+nkv)*dh) of qkv) exactly once."""
    T = qkv.shape[0]
    tr = _pick_tile(T, tr)
    n_rope_heads = nh + nkv
    return pl.pallas_call(
        functools.partial(_rope_kernel, d2=dh // 2),
        grid=(T // tr, n_rope_heads),
        in_specs=[pl.BlockSpec((tr, dh), lambda i, h: (i, h)),
                  pl.BlockSpec((tr, dh), lambda i, h: (i, 0)),
                  pl.BlockSpec((tr, dh), lambda i, h: (i, 0))],
        out_specs=pl.BlockSpec((tr, dh), lambda i, h: (i, h)),
        out_shape=jax.ShapeDtypeStruct((T, n_rope_heads * dh), qkv.dtype),
        compiler_params=pltpu.CompilerParams(
            dimension_semantics=("parallel", "parallel")),
    )(qkv, cos_full, sin_full)


def flash_attention(roped_qk, qkv, pos_col, pos_row, nh, nkv, dh, scale,
                    *, tq=128, tk=128):
    """Flash attention over token-major Q/K/V slabs.

    roped_qk: (T, (nh+nkv)*dh)   rotated q then k heads
    qkv:      (T, (nh+2nkv)*dh)  v heads read from the tail columns
    returns:  (T, nh*dh)         token-major, lane-dense for o_proj
    """
    T = qkv.shape[0]
    tq = _pick_tile(T, tq)
    tk = _pick_tile(T, tk)
    group = nh // nkv
    grid = (nh, T // tq, T // tk)
    return pl.pallas_call(
        functools.partial(_flash_attn_kernel, scale=scale),
        grid=grid,
        in_specs=[
            pl.BlockSpec((tq, 1), lambda h, qi, ki: (qi, 0)),               # pos q
            pl.BlockSpec((1, tk), lambda h, qi, ki: (0, ki)),               # pos k
            pl.BlockSpec((tq, dh), lambda h, qi, ki: (qi, h)),              # q
            pl.BlockSpec((tk, dh), lambda h, qi, ki: (ki, nh + h // group)),       # k
            pl.BlockSpec((tk, dh), lambda h, qi, ki: (ki, nh + nkv + h // group)),  # v
        ],
        out_specs=pl.BlockSpec((tq, dh), lambda h, qi, ki: (qi, h)),
        out_shape=jax.ShapeDtypeStruct((T, nh * dh), qkv.dtype),
        scratch_shapes=[
            pltpu.VMEM((tq, 1), jnp.float32),    # running max m
            pltpu.VMEM((tq, 1), jnp.float32),    # running denom l
            pltpu.VMEM((tq, dh), jnp.float32),   # running accum
        ],
        compiler_params=pltpu.CompilerParams(
            dimension_semantics=("parallel", "parallel", "arbitrary"),
            vmem_limit_bytes=VMEM_LIMIT),
    )(pos_col, pos_row, roped_qk, roped_qk, qkv)


# ------------------------ Qwen2DecoderLayer forward ------------------------

def rope_tables(positions, head_dim, theta):
    d2 = head_dim // 2
    inv_freq = 1.0 / (theta ** (jnp.arange(0, head_dim, 2, dtype=jnp.float32) / head_dim))
    freqs = positions.astype(jnp.float32)[:, None] * inv_freq[None, :]   # (T, d2)
    cos = jnp.cos(freqs)
    sin = jnp.sin(freqs)
    cos_full = jnp.concatenate([cos, cos], axis=-1)        # (T, dh)
    sin_full = jnp.concatenate([-sin, sin], axis=-1)       # (T, dh), sign folded in
    return cos_full, sin_full


def qwen2_decoder_layer(positions, hidden_states, params, cfg, residual=None):
    H = cfg["hidden_size"]
    nh = cfg["num_heads"]
    nkv = cfg["num_kv_heads"]
    dh = H // nh
    I = cfg["intermediate_size"]
    eps = cfg["eps"]
    T = hidden_states.shape[0]
    scale = dh ** -0.5

    # --- input layernorm ---
    if residual is None:
        residual = hidden_states
        h = rmsnorm(hidden_states, params["input_ln"], eps)
    else:
        h, residual = add_rmsnorm(hidden_states, residual, params["input_ln"], eps)

    # --- self attention (token-major all the way, no transposes) ---
    qkv = linear(h, params["qkv_w"], params["qkv_b"])        # (T, (nh+2nkv)*dh)
    cos_full, sin_full = rope_tables(positions, dh, cfg["rope_theta"])
    roped_qk = apply_rope(qkv, cos_full, sin_full, nh, nkv, dh)  # (T, (nh+nkv)*dh)

    pos_col = positions.astype(jnp.int32).reshape(T, 1)
    pos_row = positions.astype(jnp.int32).reshape(1, T)
    attn_out = flash_attention(roped_qk, qkv, pos_col, pos_row,
                               nh, nkv, dh, scale)           # (T, nh*dh)
    h = linear(attn_out, params["o_w"])

    # --- post-attention layernorm (fused residual add) ---
    h, residual = add_rmsnorm(h, residual, params["post_ln"], eps)

    # --- MLP: gate_up -> (SiLU*up fused into down_proj) ---
    gate_up = linear(h, params["gate_up_w"])                 # (T, 2*I)
    h = mlp_silu_down(gate_up, params["down_w"], I)
    return h, residual


# ------------------------------ reference ----------------------------------
# All matmuls run at Precision.HIGHEST so the reference is true f32 — the
# Pallas path is then only expected to deviate by MXU contract-precision
# rounding of its f32 operands (bf16-level), which the tolerance accounts for.

def ref_decoder_layer(positions, x, params, cfg, residual=None):
    H = cfg["hidden_size"]
    nh, nkv = cfg["num_heads"], cfg["num_kv_heads"]
    dh = H // nh
    I = cfg["intermediate_size"]
    eps = cfg["eps"]
    T = x.shape[0]
    scale = dh ** -0.5
    x = x.astype(jnp.float32)

    def rms(v, w):
        var = jnp.mean(v * v, axis=-1, keepdims=True)
        return v * jax.lax.rsqrt(var + eps) * w.astype(jnp.float32)

    if residual is None:
        residual = x
        h = rms(x, params["input_ln"])
    else:
        residual = x + residual.astype(jnp.float32)
        h = rms(residual, params["input_ln"])

    qkv = jnp.dot(h, params["qkv_w"].astype(jnp.float32), precision=HP) \
        + params["qkv_b"].astype(jnp.float32)
    q_size, kv_size = nh * dh, nkv * dh
    q = qkv[:, :q_size].reshape(T, nh, dh)
    k = qkv[:, q_size:q_size + kv_size].reshape(T, nkv, dh)
    v = qkv[:, q_size + kv_size:].reshape(T, nkv, dh)

    inv_freq = 1.0 / (cfg["rope_theta"] ** (jnp.arange(0, dh, 2, dtype=jnp.float32) / dh))
    freqs = positions.astype(jnp.float32)[:, None] * inv_freq[None, :]
    cos, sin = jnp.cos(freqs), jnp.sin(freqs)

    def rope(t):
        d2 = dh // 2
        x1, x2 = t[..., :d2], t[..., d2:]
        c, s = cos[:, None, :], sin[:, None, :]
        return jnp.concatenate([x1 * c - x2 * s, x2 * c + x1 * s], axis=-1)

    q, k = rope(q), rope(k)
    group = nh // nkv
    k = jnp.repeat(k, group, axis=1)
    v = jnp.repeat(v, group, axis=1)
    s = jnp.einsum("qhd,khd->hqk", q, k, precision=HP) * scale
    pos = positions.astype(jnp.int32)
    mask = pos[:, None] >= pos[None, :]
    s = jnp.where(mask[None], s, -jnp.inf)
    p = jax.nn.softmax(s, axis=-1)
    o = jnp.einsum("hqk,khd->qhd", p, v, precision=HP).reshape(T, nh * dh)
    h = jnp.dot(o, params["o_w"].astype(jnp.float32), precision=HP)

    residual = h + residual
    h = rms(residual, params["post_ln"])

    gu = jnp.dot(h, params["gate_up_w"].astype(jnp.float32), precision=HP)
    gate, up = gu[:, :I], gu[:, I:]
    act = gate * jax.nn.sigmoid(gate) * up
    h = jnp.dot(act, params["down_w"].astype(jnp.float32), precision=HP)
    return h, residual


# -------------------------------- main --------------------------------------

if __name__ == "__main__":
    cfg = dict(
        hidden_size=256,
        num_heads=2,
        num_kv_heads=1,
        intermediate_size=512,
        eps=1e-6,
        rope_theta=1000000.0,
    )
    H = cfg["hidden_size"]
    nh, nkv = cfg["num_heads"], cfg["num_kv_heads"]
    dh = H // nh                       # 128 -> lane-dense head blocks
    I = cfg["intermediate_size"]
    T = 256                            # multiple tiles on every grid axis

    key = jax.random.PRNGKey(0)
    ks = jax.random.split(key, 8)
    params = {
        "input_ln": 1.0 + 0.01 * jax.random.normal(ks[0], (H,), jnp.float32),
        "post_ln": 1.0 + 0.01 * jax.random.normal(ks[1], (H,), jnp.float32),
        "qkv_w": 0.05 * jax.random.normal(ks[2], (H, (nh + 2 * nkv) * dh), jnp.float32),
        "qkv_b": 0.05 * jax.random.normal(ks[3], ((nh + 2 * nkv) * dh,), jnp.float32),
        "o_w": 0.05 * jax.random.normal(ks[4], (nh * dh, H), jnp.float32),
        "gate_up_w": 0.05 * jax.random.normal(ks[5], (H, 2 * I), jnp.float32),
        "down_w": 0.05 * jax.random.normal(ks[6], (I, H), jnp.float32),
    }
    positions = jnp.arange(T, dtype=jnp.int32)
    hidden_states = 0.1 * jax.random.normal(ks[7], (T, H), jnp.float32)

    # Two chained layer calls: exercises both the residual=None path and the
    # fused add+RMSNorm residual path.
    out1, res1 = qwen2_decoder_layer(positions, hidden_states, params, cfg, residual=None)
    out2, res2 = qwen2_decoder_layer(positions, out1, params, cfg, residual=res1)
    out2 = jax.block_until_ready(out2)
    res2 = jax.block_until_ready(res2)

    ref1, rref1 = ref_decoder_layer(positions, hidden_states, params, cfg, residual=None)
    ref2, rref2 = ref_decoder_layer(positions, ref1, params, cfg, residual=rref1)

    # Tolerance sized for MXU contract-precision rounding of f32 operands
    # (bf16-level per matmul, compounded over two chained decoder layers).
    for got, want, name in ((out1, ref1, "out1"), (res1, rref1, "res1"),
                            (out2, ref2, "out2"), (res2, rref2, "res2")):
        if not jnp.allclose(got, want, rtol=3e-2, atol=2e-2):
            err = float(jnp.max(jnp.abs(got - want)))
            raise AssertionError(f"{name} mismatch vs reference (max abs err {err})")

    # bf16 path (MXU-native dtype for all matmuls, f32 accumulation): run for
    # compile/perf coverage with a loose numerical sanity check.
    params_bf16 = {k: v.astype(jnp.bfloat16) for k, v in params.items()}
    out_bf, res_bf = qwen2_decoder_layer(
        positions, hidden_states.astype(jnp.bfloat16), params_bf16, cfg, residual=None)
    out_bf = jax.block_until_ready(out_bf)
    out_bf32 = out_bf.astype(jnp.float32)
    diff = float(jnp.max(jnp.abs(out_bf32 - ref1)))
    if not (bool(jnp.all(jnp.isfinite(out_bf32))) and diff < 1e-1):
        raise AssertionError(f"bf16 path sanity check failed (max abs err {diff})")

    print("KERNEL_OK")
</pallas_src>

<mosaic_0001>
module attributes {stable_mosaic.version = 11 : i64} {
  func.func @_rmsnorm_kernel(%arg0: i32, %arg1: memref<256x256xf32, #tpu.memory_space<vmem>>, %arg2: memref<1x256xf32, #tpu.memory_space<vmem>>, %arg3: memref<256x256xf32, #tpu.memory_space<vmem>>) attributes {dimension_semantics = [#tpu.dimension_semantics<parallel>], iteration_bounds = array<i64: 1>, scalar_prefetch = 0 : i64, scratch_operands = 0 : i64, tpu.core_type = #tpu.core_type<tc>, window_params = [{transform_indices = @transform_0, window_bounds = array<i64: 256, 256>}, {pipeline_mode = #tpu.pipeline_mode<synchronous>, transform_indices = @transform_1, window_bounds = array<i64: 1, 256>}, {transform_indices = @transform_2, window_bounds = array<i64: 256, 256>}]} {
    %c0 = arith.constant 0 : index
    %c0_0 = arith.constant 0 : index
    %0 = vector.load %arg1[%c0, %c0_0] : memref<256x256xf32, #tpu.memory_space<vmem>>, vector<256x256xf32>
    %1 = arith.mulf %0, %0 : vector<256x256xf32>
    %cst = arith.constant dense<0.000000e+00> : vector<256xf32>
    %2 = vector.multi_reduction <add>, %1, %cst [1] : vector<256x256xf32> to vector<256xf32>
    %3 = vector.shape_cast %2 : vector<256xf32> to vector<256x1xf32>
    %cst_1 = arith.constant 2.560000e+02 : f32
    %4 = vector.broadcast %cst_1 : f32 to vector<256x1xf32>
    %5 = arith.divf %3, %4 : vector<256x1xf32>
    %cst_2 = arith.constant 9.99999997E-7 : f32
    %6 = vector.broadcast %cst_2 : f32 to vector<256x1xf32>
    %7 = arith.addf %5, %6 : vector<256x1xf32>
    %8 = math.rsqrt %7 : vector<256x1xf32>
    %9 = vector.broadcast %8 : vector<256x1xf32> to vector<256x256xf32>
    %10 = arith.mulf %0, %9 : vector<256x256xf32>
    %c0_3 = arith.constant 0 : index
    %c0_4 = arith.constant 0 : index
    %11 = vector.load %arg2[%c0_3, %c0_4] : memref<1x256xf32, #tpu.memory_space<vmem>>, vector<1x256xf32>
    %12 = vector.broadcast %11 : vector<1x256xf32> to vector<256x256xf32>
    %13 = arith.mulf %10, %12 : vector<256x256xf32>
    %c0_5 = arith.constant 0 : index
    %c0_6 = arith.constant 0 : index
    %14 = vector.load %arg3[%c0_5, %c0_6] : memref<256x256xf32, #tpu.memory_space<vmem>>, vector<256x256xf32>
    tpu.vector_store %arg3[%c0_5, %c0_6], %13 {strides = array<i32>} : memref<256x256xf32, #tpu.memory_space<vmem>>, vector<256x256xf32>,
    return
  }
  func.func @transform_0(%arg0: i32) -> (i32, i32) {
    %c0_i32 = arith.constant 0 : i32
    %c0_i32_0 = arith.constant 0 : i32
    return %arg0, %c0_i32 : i32, i32
  }
  func.func @transform_1(%arg0: i32) -> (i32, i32) {
    %c0_i32 = arith.constant 0 : i32
    %c0_i32_0 = arith.constant 0 : i32
    %c0_i32_1 = arith.constant 0 : i32
    return %c0_i32, %c0_i32_0 : i32, i32
  }
  func.func @transform_2(%arg0: i32) -> (i32, i32) {
    %c0_i32 = arith.constant 0 : i32
    %c0_i32_0 = arith.constant 0 : i32
    return %arg0, %c0_i32 : i32, i32
  }
}

</mosaic_0001>

<llo_original>
// kernel: tpu_custom_call.1
$region0: #{tpu_custom_call.1}
  #allocation0 [shape = 'u32[]', space=smem, size = 0x4, offset = 0x4, fixed_abs, tag = 'smem constant byte address 0x4 - core index']
  #allocation1 [shape = 'u32[144,128]{1,0:T(1,128)}', space=vmem, size = 0x12000, scoped, tag = 'internal scratch']
  %s0 = inlined_call_operand.hbm [shape: f32[256,256], index: 0, kind: input, shape index: {}]
  %s1 = inlined_call_operand.hbm [shape: f32[1,256], index: 1, kind: input, shape index: {}]
  %s2 = inlined_call_operand.hbm [shape: f32[256,256], index: 2, kind: output, shape index: {}]
  %s3 = sld [smem:[#allocation0]]
  $region26: #{tpu_custom_call.1} parent=0
    _
  %s5 = ssub.s32 1, %s3
  %s6 = scalar_select 0, %s5, %s3
  $region1: #{tpu_custom_call.1} parent=0
    #allocation2 [shape = 'u8[262144]{0}', space=vmem, size = 0x40000, scoped, tag = 'input window, operand 0, single buffered']
    #allocation3 [shape = 's32[1]{0}', space=sflag, size = 0x4, scoped, tag = 'scoped memory for tpu_custom_call.1']
    #allocation4 [shape = 's32[1]{0}', space=sflag, size = 0x4, scoped, tag = 'scoped memory for tpu_custom_call.1']
    #allocation5 [shape = 'u8[1024]{0}', space=vmem, size = 0x400, scoped, tag = 'input window, operand 1, single buffered']
    #allocation6 [shape = 's32[1]{0}', space=sflag, size = 0x4, scoped, tag = 'scoped memory for tpu_custom_call.1']
    #allocation7 [shape = 'u8[262144]{0}', space=vmem, size = 0x40000, scoped, tag = 'output window, operand 0, single buffered']
    %7 = vsyncpa [#allocation3], 0
    %8 = vsyncpa [#allocation6], 0
    %9 = vsyncpa [#allocation4], 0
    // Predicated region
    $region2: #{tpu_custom_call.1} parent=1 // pred_check
      _
    $region3: #{tpu_custom_call.1} parent=1 // pred_check_branch
      %11 = sbr.rel (0) target = $region5
    $region4: #{tpu_custom_call.1} parent=1 // pred_region
      %s13 = ssub.s32 8192, 8192
      %14 = vsyncadd [#allocation3], %s13
      %s15 = sshll.u32 [#allocation2], 4
      %s16 = int_to_ptr.vmem [resolvable:$true] %s15
      %21 = dma.hbm_to_vmem [thread:$0]  %s0, 8192, %s16, [#allocation3], 256, 256, 16
    $region5: #{tpu_custom_call.1} parent=1 // pred_fallthru
      _
    // Predicated region
    $region6: #{tpu_custom_call.1} parent=1 // pred_check
      _
    $region7: #{tpu_custom_call.1} parent=1 // pred_check_branch
      %23 = sbr.rel (0) target = $region9
    $region8: #{tpu_custom_call.1} parent=1 // pred_region
      %s25 = ssub.s32 32, 32
      %26 = vsyncadd [#allocation6], %s25
      %s28 = sshll.u32 [#allocation5], 4
      %s29 = int_to_ptr.vmem [resolvable:$true] %s28
      %31 = dma.hbm_to_vmem [thread:$0]  %s1, 32, %s29, [#allocation6]
    $region9: #{tpu_custom_call.1} parent=1 // pred_fallthru
      _
    // Predicated region
    $region10: #{tpu_custom_call.1} parent=1 // pred_check
      _
    $region11: #{tpu_custom_call.1} parent=1 // pred_check_branch
      %33 = sbr.rel (0) target = $region13
    $region12: #{tpu_custom_call.1} parent=1 // pred_region
      %34 = dma.done [#allocation3], 8192
    $region13: #{tpu_custom_call.1} parent=1 // pred_fallthru
      _
    // Predicated region
    $region14: #{tpu_custom_call.1} parent=1 // pred_check
      _
    $region15: #{tpu_custom_call.1} parent=1 // pred_check_branch
      %36 = sbr.rel (0) target = $region17
    $region16: #{tpu_custom_call.1} parent=1 // pred_region
      %37 = dma.done [#allocation6], 32
    $region17: #{tpu_custom_call.1} parent=1 // pred_fallthru
      _
    %v38 = vld [vmem:[#allocation2] sm:$0xff]
    %v39 = vld [vmem:[#allocation2 + $0x8] sm:$0xff]
    %v40 = vld [vmem:[#allocation2 + $0x10] sm:$0xff]
    %v41 = vld [vmem:[#allocation2 + $0x18] sm:$0xff]
    %v42 = vld [vmem:[#allocation2 + $0x20] sm:$0xff]
    %v43 = vld [vmem:[#allocation2 + $0x28] sm:$0xff]
    %v44 = vld [vmem:[#allocation2 + $0x30] sm:$0xff]
    %v45 = vld [vmem:[#allocation2 + $0x38] sm:$0xff]
    %v46 = vld [vmem:[#allocation2 + $0x40] sm:$0xff]
    %v47 = vld [vmem:[#allocation2 + $0x48] sm:$0xff]
    %v48 = vld [vmem:[#allocation2 + $0x50] sm:$0xff]
    %v49 = vld [vmem:[#allocation2 + $0x58] sm:$0xff]
    %v50 = vld [vmem:[#allocation2 + $0x60] sm:$0xff]
    %v51 = vld [vmem:[#allocation2 + $0x68] sm:$0xff]
    %v52 = vld [vmem:[#allocation2 + $0x70] sm:$0xff]
    %v53 = vld [vmem:[#allocation2 + $0x78] sm:$0xff]
    %v54 = vld [vmem:[#allocation2 + $0x80] sm:$0xff]
    %v55 = vld [vmem:[#allocation2 + $0x88] sm:$0xff]
    %v56 = vld [vmem:[#allocation2 + $0x90] sm:$0xff]
    %v57 = vld [vmem:[#allocation2 + $0x98] sm:$0xff]
    %v58 = vld [vmem:[#allocation2 + $0xa0] sm:$0xff]
    %v59 = vld [vmem:[#allocation2 + $0xa8] sm:$0xff]
    %v60 = vld [vmem:[#allocation2 + $0xb0] sm:$0xff]
    %v61 = vld [vmem:[#allocation2 + $0xb8] sm:$0xff]
    %v62 = vld [vmem:[#allocation2 + $0xc0] sm:$0xff]
    %v63 = vld [vmem:[#allocation2 + $0xc8] sm:$0xff]
    %v64 = vld [vmem:[#allocation2 + $0xd0] sm:$0xff]
    %v65 = vld [vmem:[#allocation2 + $0xd8] sm:$0xff]
    %v66 = vld [vmem:[#allocation2 + $0xe0] sm:$0xff]
    %v67 = vld [vmem:[#allocation2 + $0xe8] sm:$0xff]
    %v68 = vld [vmem:[#allocation2 + $0xf0] sm:$0xff]
    %v69 = vld [vmem:[#allocation2 + $0xf8] sm:$0xff]
    %v70 = vld [vmem:[#allocation2 + $0x100] sm:$0xff]
    %v71 = vld [vmem:[#allocation2 + $0x108] sm:$0xff]
    %v72 = vld [vmem:[#allocation2 + $0x110] sm:$0xff]
    %v73 = vld [vmem:[#allocation2 + $0x118] sm:$0xff]
    %v74 = vld [vmem:[#allocation2 + $0x120] sm:$0xff]
    %v75 = vld [vmem:[#allocation2 + $0x128] sm:$0xff]
    %v76 = vld [vmem:[#allocation2 + $0x130] sm:$0xff]
    %v77 = vld [vmem:[#allocation2 + $0x138] sm:$0xff]
    %v78 = vld [vmem:[#allocation2 + $0x140] sm:$0xff]
    %v79 = vld [vmem:[#allocation2 + $0x148] sm:$0xff]
    %v80 = vld [vmem:[#allocation2 + $0x150] sm:$0xff]
    %v81 = vld [vmem:[#allocation2 + $0x158] sm:$0xff]
    %v82 = vld [vmem:[#allocation2 + $0x160] sm:$0xff]
    %v83 = vld [vmem:[#allocation2 + $0x168] sm:$0xff]
    %v84 = vld [vmem:[#allocation2 + $0x170] sm:$0xff]
    %v85 = vld [vmem:[#allocation2 + $0x178] sm:$0xff]
    %v86 = vld [vmem:[#allocation2 + $0x180] sm:$0xff]
    %v87 = vld [vmem:[#allocation2 + $0x188] sm:$0xff]
    %v88 = vld [vmem:[#allocation2 + $0x190] sm:$0xff]
    %v89 = vld [vmem:[#allocation2 + $0x198] sm:$0xff]
    %v90 = vld [vmem:[#allocation2 + $0x1a0] sm:$0xff]
    %v91 = vld [vmem:[#allocation2 + $0x1a8] sm:$0xff]
    %v92 = vld [vmem:[#allocation2 + $0x1b0] sm:$0xff]
    %v93 = vld [vmem:[#allocation2 + $0x1b8] sm:$0xff]
    %v94 = vld [vmem:[#allocation2 + $0x1c0] sm:$0xff]
    %v95 = vld [vmem:[#allocation2 + $0x1c8] sm:$0xff]
    %v96 = vld [vmem:[#allocation2 + $0x1d0] sm:$0xff]
    %v97 = vld [vmem:[#allocation2 + $0x1d8] sm:$0xff]
    %v98 = vld [vmem:[#allocation2 + $0x1e0] sm:$0xff]
    %v99 = vld [vmem:[#allocation2 + $0x1e8] sm:$0xff]
    %v100 = vld [vmem:[#allocation2 + $0x1f0] sm:$0xff]
    %v101 = vld [vmem:[#allocation2 + $0x1f8] sm:$0xff]
    %v102 = vmul.f32 %v38, %v38
    %v103 = vmul.f32 %v39, %v39
    %v104 = vmul.f32 %v40, %v40
    %v105 = vmul.f32 %v41, %v41
    %v106 = vmul.f32 %v42, %v42
    %v107 = vmul.f32 %v43, %v43
    %v108 = vmul.f32 %v44, %v44
    %v109 = vmul.f32 %v45, %v45
    %v110 = vmul.f32 %v46, %v46
    %v111 = vmul.f32 %v47, %v47
    %v112 = vmul.f32 %v48, %v48
    %v113 = vmul.f32 %v49, %v49
    %v114 = vmul.f32 %v50, %v50
    %v115 = vmul.f32 %v51, %v51
    %v116 = vmul.f32 %v52, %v52
    %v117 = vmul.f32 %v53, %v53
    %v118 = vmul.f32 %v54, %v54
    %v119 = vmul.f32 %v55, %v55
    %v120 = vmul.f32 %v56, %v56
    %v121 = vmul.f32 %v57, %v57
    %v122 = vmul.f32 %v58, %v58
    %v123 = vmul.f32 %v59, %v59
    %v124 = vmul.f32 %v60, %v60
    %v125 = vmul.f32 %v61, %v61
    %v126 = vmul.f32 %v62, %v62
    %v127 = vmul.f32 %v63, %v63
    %v128 = vmul.f32 %v64, %v64
    %v129 = vmul.f32 %v65, %v65
    %v130 = vmul.f32 %v66, %v66
    %v131 = vmul.f32 %v67, %v67
    %v132 = vmul.f32 %v68, %v68
    %v133 = vmul.f32 %v69, %v69
    %v134 = vmul.f32 %v70, %v70
    %v135 = vmul.f32 %v71, %v71
    %v136 = vmul.f32 %v72, %v72
    %v137 = vmul.f32 %v73, %v73
    %v138 = vmul.f32 %v74, %v74
    %v139 = vmul.f32 %v75, %v75
    %v140 = vmul.f32 %v76, %v76
    %v141 = vmul.f32 %v77, %v77
    %v142 = vmul.f32 %v78, %v78
    %v143 = vmul.f32 %v79, %v79
    %v144 = vmul.f32 %v80, %v80
    %v145 = vmul.f32 %v81, %v81
    %v146 = vmul.f32 %v82, %v82
    %v147 = vmul.f32 %v83, %v83
    %v148 = vmul.f32 %v84, %v84
    %v149 = vmul.f32 %v85, %v85
    %v150 = vmul.f32 %v86, %v86
    %v151 = vmul.f32 %v87, %v87
    %v152 = vmul.f32 %v88, %v88
    %v153 = vmul.f32 %v89, %v89
    %v154 = vmul.f32 %v90, %v90
    %v155 = vmul.f32 %v91, %v91
    %v156 = vmul.f32 %v92, %v92
    %v157 = vmul.f32 %v93, %v93
    %v158 = vmul.f32 %v94, %v94
    %v159 = vmul.f32 %v95, %v95
    %v160 = vmul.f32 %v96, %v96
    %v161 = vmul.f32 %v97, %v97
    %v162 = vmul.f32 %v98, %v98
    %v163 = vmul.f32 %v99, %v99
    %v164 = vmul.f32 %v100, %v100
    %v165 = vmul.f32 %v101, %v101
    %v166 = vadd.f32 %v102, %v103
    %167 = vadd.xlane.f32.xlu0 %v166
    %v168 = vpop.xlane.xlu0 %167
    %v169 = vadd.f32 %v104, %v105
    %170 = vadd.xlane.f32.xlu0 %v169
    %v171 = vpop.xlane.xlu0 %170
    %v172 = vadd.f32 %v106, %v107
    %173 = vadd.xlane.f32.xlu0 %v172
    %v174 = vpop.xlane.xlu0 %173
    %v175 = vadd.f32 %v108, %v109
    %176 = vadd.xlane.f32.xlu0 %v175
    %v177 = vpop.xlane.xlu0 %176
    %v178 = vadd.f32 %v110, %v111
    %179 = vadd.xlane.f32.xlu0 %v178
    %v180 = vpop.xlane.xlu0 %179
    %v181 = vadd.f32 %v112, %v113
    %182 = vadd.xlane.f32.xlu0 %v181
    %v183 = vpop.xlane.xlu0 %182
    %v184 = vadd.f32 %v114, %v115
    %185 = vadd.xlane.f32.xlu0 %v184
    %v186 = vpop.xlane.xlu0 %185
    %v187 = vadd.f32 %v116, %v117
    %188 = vadd.xlane.f32.xlu0 %v187
    %v189 = vpop.xlane.xlu0 %188
    %v190 = vadd.f32 %v118, %v119
    %191 = vadd.xlane.f32.xlu0 %v190
    %v192 = vpop.xlane.xlu0 %191
    %v193 = vadd.f32 %v120, %v121
    %194 = vadd.xlane.f32.xlu0 %v193
    %v195 = vpop.xlane.xlu0 %194
    %v196 = vadd.f32 %v122, %v123
    %197 = vadd.xlane.f32.xlu0 %v196
    %v198 = vpop.xlane.xlu0 %197
    %v199 = vadd.f32 %v124, %v125
    %200 = vadd.xlane.f32.xlu0 %v199
    %v201 = vpop.xlane.xlu0 %200
    %v202 = vadd.f32 %v126, %v127
    %203 = vadd.xlane.f32.xlu0 %v202
    %v204 = vpop.xlane.xlu0 %203
    %v205 = vadd.f32 %v128, %v129
    %206 = vadd.xlane.f32.xlu0 %v205
    %v207 = vpop.xlane.xlu0 %206
    %v208 = vadd.f32 %v130, %v131
    %209 = vadd.xlane.f32.xlu0 %v208
    %v210 = vpop.xlane.xlu0 %209
    %v211 = vadd.f32 %v132, %v133
    %212 = vadd.xlane.f32.xlu0 %v211
    %v213 = vpop.xlane.xlu0 %212
    %v214 = vadd.f32 %v134, %v135
    %215 = vadd.xlane.f32.xlu0 %v214
    %v216 = vpop.xlane.xlu0 %215
    %v217 = vadd.f32 %v136, %v137
    %218 = vadd.xlane.f32.xlu0 %v217
    %v219 = vpop.xlane.xlu0 %218
    %v220 = vadd.f32 %v138, %v139
    %221 = vadd.xlane.f32.xlu0 %v220
    %v222 = vpop.xlane.xlu0 %221
    %v223 = vadd.f32 %v140, %v141
    %224 = vadd.xlane.f32.xlu0 %v223
    %v225 = vpop.xlane.xlu0 %224
    %v226 = vadd.f32 %v142, %v143
    %227 = vadd.xlane.f32.xlu0 %v226
    %v228 = vpop.xlane.xlu0 %227
    %v229 = vadd.f32 %v144, %v145
    %230 = vadd.xlane.f32.xlu0 %v229
    %v231 = vpop.xlane.xlu0 %230
    %v232 = vadd.f32 %v146, %v147
    %233 = vadd.xlane.f32.xlu0 %v232
    %v234 = vpop.xlane.xlu0 %233
    %v235 = vadd.f32 %v148, %v149
    %236 = vadd.xlane.f32.xlu0 %v235
    %v237 = vpop.xlane.xlu0 %236
    %v238 = vadd.f32 %v150, %v151
    %239 = vadd.xlane.f32.xlu0 %v238
    %v240 = vpop.xlane.xlu0 %239
    %v241 = vadd.f32 %v152, %v153
    %242 = vadd.xlane.f32.xlu0 %v241
    %v243 = vpop.xlane.xlu0 %242
    %v244 = vadd.f32 %v154, %v155
    %245 = vadd.xlane.f32.xlu0 %v244
    %v246 = vpop.xlane.xlu0 %245
    %v247 = vadd.f32 %v156, %v157
    %248 = vadd.xlane.f32.xlu0 %v247
    %v249 = vpop.xlane.xlu0 %248
    %v250 = vadd.f32 %v158, %v159
    %251 = vadd.xlane.f32.xlu0 %v250
    %v252 = vpop.xlane.xlu0 %251
    %v253 = vadd.f32 %v160, %v161
    %254 = vadd.xlane.f32.xlu0 %v253
    %v255 = vpop.xlane.xlu0 %254
    %v256 = vadd.f32 %v162, %v163
    %257 = vadd.xlane.f32.xlu0 %v256
    %v258 = vpop.xlane.xlu0 %257
    %v259 = vadd.f32 %v164, %v165
    %260 = vadd.xlane.f32.xlu0 %v259
    %v261 = vpop.xlane.xlu0 %260
    %v262 = vrcp.pop 256.0
    %v263 = vmul.f32 %v168, %v262
    %v264 = vmul.f32 %v171, %v262
    %v265 = vmul.f32 %v174, %v262
    %v266 = vmul.f32 %v177, %v262
    %v267 = vmul.f32 %v180, %v262
    %v268 = vmul.f32 %v183, %v262
    %v269 = vmul.f32 %v186, %v262
    %v270 = vmul.f32 %v189, %v262
    %v271 = vmul.f32 %v192, %v262
    %v272 = vmul.f32 %v195, %v262
    %v273 = vmul.f32 %v198, %v262
    %v274 = vmul.f32 %v201, %v262
    %v275 = vmul.f32 %v204, %v262
    %v276 = vmul.f32 %v207, %v262
    %v277 = vmul.f32 %v210, %v262
    %v278 = vmul.f32 %v213, %v262
    %v279 = vmul.f32 %v216, %v262
    %v280 = vmul.f32 %v219, %v262
    %v281 = vmul.f32 %v222, %v262
    %v282 = vmul.f32 %v225, %v262
    %v283 = vmul.f32 %v228, %v262
    %v284 = vmul.f32 %v231, %v262
    %v285 = vmul.f32 %v234, %v262
    %v286 = vmul.f32 %v237, %v262
    %v287 = vmul.f32 %v240, %v262
    %v288 = vmul.f32 %v243, %v262
    %v289 = vmul.f32 %v246, %v262
    %v290 = vmul.f32 %v249, %v262
    %v291 = vmul.f32 %v252, %v262
    %v292 = vmul.f32 %v255, %v262
    %v293 = vmul.f32 %v258, %v262
    %v294 = vmul.f32 %v261, %v262
    %v295 = vadd.f32 %v263, 1e-06
    %v296 = vadd.f32 %v264, 1e-06
    %v297 = vadd.f32 %v265, 1e-06
    %v298 = vadd.f32 %v266, 1e-06
    %v299 = vadd.f32 %v267, 1e-06
    %v300 = vadd.f32 %v268, 1e-06
    %v301 = vadd.f32 %v269, 1e-06
    %v302 = vadd.f32 %v270, 1e-06
    %v303 = vadd.f32 %v271, 1e-06
    %v304 = vadd.f32 %v272, 1e-06
    %v305 = vadd.f32 %v273, 1e-06
    %v306 = vadd.f32 %v274, 1e-06
    %v307 = vadd.f32 %v275, 1e-06
    %v308 = vadd.f32 %v276, 1e-06
    %v309 = vadd.f32 %v277, 1e-06
    %v310 = vadd.f32 %v278, 1e-06
    %v311 = vadd.f32 %v279, 1e-06
    %v312 = vadd.f32 %v280, 1e-06
    %v313 = vadd.f32 %v281, 1e-06
    %v314 = vadd.f32 %v282, 1e-06
    %v315 = vadd.f32 %v283, 1e-06
    %v316 = vadd.f32 %v284, 1e-06
    %v317 = vadd.f32 %v285, 1e-06
    %v318 = vadd.f32 %v286, 1e-06
    %v319 = vadd.f32 %v287, 1e-06
    %v320 = vadd.f32 %v288, 1e-06
    %v321 = vadd.f32 %v289, 1e-06
    %v322 = vadd.f32 %v290, 1e-06
    %v323 = vadd.f32 %v291, 1e-06
    %v324 = vadd.f32 %v292, 1e-06
    %v325 = vadd.f32 %v293, 1e-06
    %v326 = vadd.f32 %v294, 1e-06
    %v327 = vrsqrt.pop %v295
    %v328 = vrsqrt.pop %v296
    %v329 = vrsqrt.pop %v297
    %v330 = vrsqrt.pop %v298
    %v331 = vrsqrt.pop %v299
    %v332 = vrsqrt.pop %v300
    %v333 = vrsqrt.pop %v301
    %v334 = vrsqrt.pop %v302
    %v335 = vrsqrt.pop %v303
    %v336 = vrsqrt.pop %v304
    %v337 = vrsqrt.pop %v305
    %v338 = vrsqrt.pop %v306
    %v339 = vrsqrt.pop %v307
    %v340 = vrsqrt.pop %v308
    %v341 = vrsqrt.pop %v309
    %v342 = vrsqrt.pop %v310
    %v343 = vrsqrt.pop %v311
    %v344 = vrsqrt.pop %v312
    %v345 = vrsqrt.pop %v313
    %v346 = vrsqrt.pop %v314
    %v347 = vrsqrt.pop %v315
    %v348 = vrsqrt.pop %v316
    %v349 = vrsqrt.pop %v317
    %v350 = vrsqrt.pop %v318
    %v351 = vrsqrt.pop %v319
    %v352 = vrsqrt.pop %v320
    %v353 = vrsqrt.pop %v321
    %v354 = vrsqrt.pop %v322
    %v355 = vrsqrt.pop %v323
    %v356 = vrsqrt.pop %v324
    %v357 = vrsqrt.pop %v325
    %v358 = vrsqrt.pop %v326
    %v359 = vmul.f32 %v38, %v327
    %v360 = vmul.f32 %v39, %v327
    %v361 = vmul.f32 %v40, %v328
    %v362 = vmul.f32 %v41, %v328
    %v363 = vmul.f32 %v42, %v329
    %v364 = vmul.f32 %v43, %v329
    %v365 = vmul.f32 %v44, %v330
    %v366 = vmul.f32 %v45, %v330
    %v367 = vmul.f32 %v46, %v331
    %v368 = vmul.f32 %v47, %v331
    %v369 = vmul.f32 %v48, %v332
    %v370 = vmul.f32 %v49, %v332
    %v371 = vmul.f32 %v50, %v333
    %v372 = vmul.f32 %v51, %v333
    %v373 = vmul.f32 %v52, %v334
    %v374 = vmul.f32 %v53, %v334
    %v375 = vmul.f32 %v54, %v335
    %v376 = vmul.f32 %v55, %v335
    %v377 = vmul.f32 %v56, %v336
    %v378 = vmul.f32 %v57, %v336
    %v379 = vmul.f32 %v58, %v337
    %v380 = vmul.f32 %v59, %v337
    %v381 = vmul.f32 %v60, %v338
    %v382 = vmul.f32 %v61, %v338
    %v383 = vmul.f32 %v62, %v339
    %v384 = vmul.f32 %v63, %v339
    %v385 = vmul.f32 %v64, %v340
    %v386 = vmul.f32 %v65, %v340
    %v387 = vmul.f32 %v66, %v341
    %v388 = vmul.f32 %v67, %v341
    %v389 = vmul.f32 %v68, %v342
    %v390 = vmul.f32 %v69, %v342
    %v391 = vmul.f32 %v70, %v343
    %v392 = vmul.f32 %v71, %v343
    %v393 = vmul.f32 %v72, %v344
    %v394 = vmul.f32 %v73, %v344
    %v395 = vmul.f32 %v74, %v345
    %v396 = vmul.f32 %v75, %v345
    %v397 = vmul.f32 %v76, %v346
    %v398 = vmul.f32 %v77, %v346
    %v399 = vmul.f32 %v78, %v347
    %v400 = vmul.f32 %v79, %v347
    %v401 = vmul.f32 %v80, %v348
    %v402 = vmul.f32 %v81, %v348
    %v403 = vmul.f32 %v82, %v349
    %v404 = vmul.f32 %v83, %v349
    %v405 = vmul.f32 %v84, %v350
    %v406 = vmul.f32 %v85, %v350
    %v407 = vmul.f32 %v86, %v351
    %v408 = vmul.f32 %v87, %v351
    %v409 = vmul.f32 %v88, %v352
    %v410 = vmul.f32 %v89, %v352
    %v411 = vmul.f32 %v90, %v353
    %v412 = vmul.f32 %v91, %v353
    %v413 = vmul.f32 %v92, %v354
    %v414 = vmul.f32 %v93, %v354
    %v415 = vmul.f32 %v94, %v355
    %v416 = vmul.f32 %v95, %v355
    %v417 = vmul.f32 %v96, %v356
    %v418 = vmul.f32 %v97, %v356
    %v419 = vmul.f32 %v98, %v357
    %v420 = vmul.f32 %v99, %v357
    %v421 = vmul.f32 %v100, %v358
    %v422 = vmul.f32 %v101, %v358
    %v423 = vld [vmem:[#allocation5] sm:$0x3]
    %v425 = vlaneseq
    %v426 = vshrl.u32 %v425, 7
    %v427 = vsub.s32 0, %v426
    %v428 = vrot.slane %v423, %v427
    %v429 = vlaneseq
    %v430 = vshrl.u32 %v429, 7
    %v431 = vsub.s32 1, %v430
    %v432 = vrot.slane %v423, %v431
    %v435 = vmul.f32 %v359, %v428
    %v436 = vmul.f32 %v360, %v432
    %v437 = vmul.f32 %v361, %v428
    %v438 = vmul.f32 %v362, %v432
    %v439 = vmul.f32 %v363, %v428
    %v440 = vmul.f32 %v364, %v432
    %v441 = vmul.f32 %v365, %v428
    %v442 = vmul.f32 %v366, %v432
    %v443 = vmul.f32 %v367, %v428
    %v444 = vmul.f32 %v368, %v432
    %v445 = vmul.f32 %v369, %v428
    %v446 = vmul.f32 %v370, %v432
    %v447 = vmul.f32 %v371, %v428
    %v448 = vmul.f32 %v372, %v432
    %v449 = vmul.f32 %v373, %v428
    %v450 = vmul.f32 %v374, %v432
    %v451 = vmul.f32 %v375, %v428
    %v452 = vmul.f32 %v376, %v432
    %v453 = vmul.f32 %v377, %v428
    %v454 = vmul.f32 %v378, %v432
    %v455 = vmul.f32 %v379, %v428
    %v456 = vmul.f32 %v380, %v432
    %v457 = vmul.f32 %v381, %v428
    %v458 = vmul.f32 %v382, %v432
    %v459 = vmul.f32 %v383, %v428
    %v460 = vmul.f32 %v384, %v432
    %v461 = vmul.f32 %v385, %v428
    %v462 = vmul.f32 %v386, %v432
    %v463 = vmul.f32 %v387, %v428
    %v464 = vmul.f32 %v388, %v432
    %v465 = vmul.f32 %v389, %v428
    %v466 = vmul.f32 %v390, %v432
    %v467 = vmul.f32 %v391, %v428
    %v468 = vmul.f32 %v392, %v432
    %v469 = vmul.f32 %v393, %v428
    %v470 = vmul.f32 %v394, %v432
    %v471 = vmul.f32 %v395, %v428
    %v472 = vmul.f32 %v396, %v432
    %v473 = vmul.f32 %v397, %v428
    %v474 = vmul.f32 %v398, %v432
    %v475 = vmul.f32 %v399, %v428
    %v476 = vmul.f32 %v400, %v432
    %v477 = vmul.f32 %v401, %v428
    %v478 = vmul.f32 %v402, %v432
    %v479 = vmul.f32 %v403, %v428
    %v480 = vmul.f32 %v404, %v432
    %v481 = vmul.f32 %v405, %v428
    %v482 = vmul.f32 %v406, %v432
    %v483 = vmul.f32 %v407, %v428
    %v484 = vmul.f32 %v408, %v432
    %v485 = vmul.f32 %v409, %v428
    %v486 = vmul.f32 %v410, %v432
    %v487 = vmul.f32 %v411, %v428
    %v488 = vmul.f32 %v412, %v432
    %v489 = vmul.f32 %v413, %v428
    %v490 = vmul.f32 %v414, %v432
    %v491 = vmul.f32 %v415, %v428
    %v492 = vmul.f32 %v416, %v432
    %v493 = vmul.f32 %v417, %v428
    %v494 = vmul.f32 %v418, %v432
    %v495 = vmul.f32 %v419, %v428
    %v496 = vmul.f32 %v420, %v432
    %v497 = vmul.f32 %v421, %v428
    %v498 = vmul.f32 %v422, %v432
    %499 = vst [vmem:[#allocation7] sm:$0xff] %v435
    %500 = vst [vmem:[#allocation7 + $0x8] sm:$0xff] %v436
    %501 = vst [vmem:[#allocation7 + $0x10] sm:$0xff] %v437
    %502 = vst [vmem:[#allocation7 + $0x18] sm:$0xff] %v438
    %503 = vst [vmem:[#allocation7 + $0x20] sm:$0xff] %v439
    %504 = vst [vmem:[#allocation7 + $0x28] sm:$0xff] %v440
    %505 = vst [vmem:[#allocation7 + $0x30] sm:$0xff] %v441
    %506 = vst [vmem:[#allocation7 + $0x38] sm:$0xff] %v442
    %507 = vst [vmem:[#allocation7 + $0x40] sm:$0xff] %v443
    %508 = vst [vmem:[#allocation7 + $0x48] sm:$0xff] %v444
    %509 = vst [vmem:[#allocation7 + $0x50] sm:$0xff] %v445
    %510 = vst [vmem:[#allocation7 + $0x58] sm:$0xff] %v446
    %511 = vst [vmem:[#allocation7 + $0x60] sm:$0xff] %v447
    %512 = vst [vmem:[#allocation7 + $0x68] sm:$0xff] %v448
    %513 = vst [vmem:[#allocation7 + $0x70] sm:$0xff] %v449
    %514 = vst [vmem:[#allocation7 + $0x78] sm:$0xff] %v450
    %515 = vst [vmem:[#allocation7 + $0x80] sm:$0xff] %v451
    %516 = vst [vmem:[#allocation7 + $0x88] sm:$0xff] %v452
    %517 = vst [vmem:[#allocation7 + $0x90] sm:$0xff] %v453
    %518 = vst [vmem:[#allocation7 + $0x98] sm:$0xff] %v454
    %519 = vst [vmem:[#allocation7 + $0xa0] sm:$0xff] %v455
    %520 = vst [vmem:[#allocation7 + $0xa8] sm:$0xff] %v456
    %521 = vst [vmem:[#allocation7 + $0xb0] sm:$0xff] %v457
    %522 = vst [vmem:[#allocation7 + $0xb8] sm:$0xff] %v458
    %523 = vst [vmem:[#allocation7 + $0xc0] sm:$0xff] %v459
    %524 = vst [vmem:[#allocation7 + $0xc8] sm:$0xff] %v460
    %525 = vst [vmem:[#allocation7 + $0xd0] sm:$0xff] %v461
    %526 = vst [vmem:[#allocation7 + $0xd8] sm:$0xff] %v462
    %527 = vst [vmem:[#allocation7 + $0xe0] sm:$0xff] %v463
    %528 = vst [vmem:[#allocation7 + $0xe8] sm:$0xff] %v464
    %529 = vst [vmem:[#allocation7 + $0xf0] sm:$0xff] %v465
    %530 = vst [vmem:[#allocation7 + $0xf8] sm:$0xff] %v466
    %531 = vst [vmem:[#allocation7 + $0x100] sm:$0xff] %v467
    %532 = vst [vmem:[#allocation7 + $0x108] sm:$0xff] %v468
    %533 = vst [vmem:[#allocation7 + $0x110] sm:$0xff] %v469
    %534 = vst [vmem:[#allocation7 + $0x118] sm:$0xff] %v470
    %535 = vst [vmem:[#allocation7 + $0x120] sm:$0xff] %v471
    %536 = vst [vmem:[#allocation7 + $0x128] sm:$0xff] %v472
    %537 = vst [vmem:[#allocation7 + $0x130] sm:$0xff] %v473
    %538 = vst [vmem:[#allocation7 + $0x138] sm:$0xff] %v474
    %539 = vst [vmem:[#allocation7 + $0x140] sm:$0xff] %v475
    %540 = vst [vmem:[#allocation7 + $0x148] sm:$0xff] %v476
    %541 = vst [vmem:[#allocation7 + $0x150] sm:$0xff] %v477
    %542 = vst [vmem:[#allocation7 + $0x158] sm:$0xff] %v478
    %543 = vst [vmem:[#allocation7 + $0x160] sm:$0xff] %v479
    %544 = vst [vmem:[#allocation7 + $0x168] sm:$0xff] %v480
    %545 = vst [vmem:[#allocation7 + $0x170] sm:$0xff] %v481
    %546 = vst [vmem:[#allocation7 + $0x178] sm:$0xff] %v482
    %547 = vst [vmem:[#allocation7 + $0x180] sm:$0xff] %v483
    %548 = vst [vmem:[#allocation7 + $0x188] sm:$0xff] %v484
    %549 = vst [vmem:[#allocation7 + $0x190] sm:$0xff] %v485
    %550 = vst [vmem:[#allocation7 + $0x198] sm:$0xff] %v486
    %551 = vst [vmem:[#allocation7 + $0x1a0] sm:$0xff] %v487
    %552 = vst [vmem:[#allocation7 + $0x1a8] sm:$0xff] %v488
    %553 = vst [vmem:[#allocation7 + $0x1b0] sm:$0xff] %v489
    %554 = vst [vmem:[#allocation7 + $0x1b8] sm:$0xff] %v490
    %555 = vst [vmem:[#allocation7 + $0x1c0] sm:$0xff] %v491
    %556 = vst [vmem:[#allocation7 + $0x1c8] sm:$0xff] %v492
    %557 = vst [vmem:[#allocation7 + $0x1d0] sm:$0xff] %v493
    %558 = vst [vmem:[#allocation7 + $0x1d8] sm:$0xff] %v494
    %559 = vst [vmem:[#allocation7 + $0x1e0] sm:$0xff] %v495
    %560 = vst [vmem:[#allocation7 + $0x1e8] sm:$0xff] %v496
    %561 = vst [vmem:[#allocation7 + $0x1f0] sm:$0xff] %v497
    %562 = vst [vmem:[#allocation7 + $0x1f8] sm:$0xff] %v498
    // Predicated region
    $region18: #{tpu_custom_call.1} parent=1 // pred_check
      _
    $region19: #{tpu_custom_call.1} parent=1 // pred_check_branch
      %564 = sbr.rel (0) target = $region21
    $region20: #{tpu_custom_call.1} parent=1 // pred_region
      %s566 = ssub.s32 8192, 8192
      %567 = vsyncadd [#allocation4], %s566
      %s568 = sshll.u32 [#allocation7], 4
      %s569 = int_to_ptr.vmem [resolvable:$true] %s568
      %574 = dma.vmem_to_hbm [thread:$0]  %s569, 8192, %s2, [#allocation4], 256, 256, 16
    $region21: #{tpu_custom_call.1} parent=1 // pred_fallthru
      _
    // Predicated region
    $region22: #{tpu_custom_call.1} parent=1 // pred_check
      _
    $region23: #{tpu_custom_call.1} parent=1 // pred_check_branch
      %576 = sbr.rel (0) target = $region25
    $region24: #{tpu_custom_call.1} parent=1 // pred_region
      %577 = dma.done [#allocation4], 8192
    $region25: #{tpu_custom_call.1} parent=1 // pred_fallthru
      _
    %578 = vsyncpa [#allocation3], 1
    %579 = vsyncpa [#allocation6], 1
    %580 = vsyncpa [#allocation4], 1

</llo_original>
